<compile_context>
chip_gen: v5e
topology: v5e:2x2
jax: 0.10.0
libtpu: 0.0.40
codegen_flags: <defaults>
</compile_context>

<pallas_src>
import jax
import jax.numpy as jnp
from jax.experimental import pallas as pl
from jax.experimental.pallas import tpu as pltpu


# ----------------------------- small helpers -------------------------------

def _round_up(v, m):
    return ((v + m - 1) // m) * m


def _vmem_capacity_bytes():
    """Best-effort physical VMEM per core; conservative fallback."""
    try:
        cap = int(pltpu.get_tpu_info().vmem_capacity_bytes)
        if cap > 0:
            return cap
    except Exception:
        pass
    return 64 * 1024 * 1024          # v7x per-TC size: safe on every generation


def _min_grid_steps():
    """v7x has 2 TensorCores per chip -> want >=2 'parallel' grid steps."""
    try:
        kind = jax.devices()[0].device_kind.lower()
    except Exception:
        return 1
    return 2 if ("v7" in kind or "7x" in kind) else 1


def _choose_batch_tile(B, N, F, max_h, x_bytes, budget_bytes, min_steps):
    """Largest divisor of B that keeps >= min_steps grid steps and fits budget."""
    best = 1
    for bt in range(1, B + 1):
        if B % bt:
            continue
        if (B // bt) < min_steps and bt > 1:
            continue                 # keep both v7x TCs busy when possible
        # rough per-step VMEM: double-buffered activation slab + f32 intermediates
        est = 2 * bt * N * F * x_bytes + 3 * bt * N * max_h * 4
        if est <= budget_bytes:
            best = bt
    return best


# ------------------------------- the kernel --------------------------------

def make_readout_kernel(num_readout: int, compute_dtype):
    """Build a kernel for `num_readout` readout Linear layers."""

    def kernel(x_ref, wp_ref, w0p_ref, w0l_ref, b0_ref, *rest):
        o_ref = rest[-1]
        layer_refs = rest[:-1]                     # [W1, b1, W2, b2, ...]

        x = x_ref[...]                             # (Bt, N, F), storage dtype
        bt, n_nodes, n_feat = x.shape

        # ---- pooled branch (rank-1): only (Bt, F) rows ever hit the MXU ----
        # 1/N is folded into wp on the host.  Node-sum accumulates in f32.
        pooled = jnp.sum(x.astype(jnp.float32), axis=1)             # (Bt, F)
        h_pooled = jnp.dot(pooled.astype(compute_dtype), wp_ref[...],
                           preferred_element_type=jnp.float32)      # (Bt, F)
        hp = jnp.maximum(h_pooled, 0.0).astype(compute_dtype)       # relu, tiny
        pooled_contrib = jnp.dot(hp, w0p_ref[...],
                                 preferred_element_type=jnp.float32)  # (Bt, H0)

        # ---- local branch, batch-folded: (Bt*N, F) @ (F, H0) ----
        # relu is exact in any dtype; doing it in compute_dtype keeps the VPU
        # work on packed vregs (v6e/v7x).  N % 8 == 0 keeps the flatten cheap.
        f_local = jnp.maximum(x, 0.0).astype(compute_dtype)
        f_local2 = f_local.reshape(bt * n_nodes, n_feat)
        local_contrib = jnp.dot(f_local2, w0l_ref[...],
                                preferred_element_type=jnp.float32)  # (Bt*N, H0)

        h0 = local_contrib.shape[-1]
        feats = (local_contrib.reshape(bt, n_nodes, h0)
                 + pooled_contrib[:, None, :]       # broadcast pooled row
                 + b0_ref[...])                     # (1, H0) f32 bias
        feats = feats.reshape(bt * n_nodes, h0)     # f32 accumulator

        # ---- remaining readout layers (relu between layers, none after last) ----
        for i in range(1, num_readout):
            feats = jnp.maximum(feats.astype(compute_dtype), 0.0)   # bf16 relu
            w = layer_refs[2 * (i - 1)][...]
            b = layer_refs[2 * (i - 1) + 1][...]
            feats = jnp.dot(feats, w, preferred_element_type=jnp.float32) + b

        o_ref[...] = feats.reshape(bt, n_nodes, feats.shape[-1]).astype(o_ref.dtype)

    return kernel


# ------------------------------- the wrapper --------------------------------

def readout_forward(x, w_pool, readout_ws, readout_bs, *,
                    batch_tile=None, compute_dtype=jnp.bfloat16,
                    out_dtype=None, single_buffer_weights=True):
    """Pallas-backed ReadoutLayer.forward.

    x          : (B, N, F) float32
    w_pool     : (F, F)        -- layer_pooled weight, (in, out), no bias
    readout_ws : list of (n_in, n_out) weights; first has n_in == 2F
    readout_bs : list of (n_out,) biases
    """
    B, N, F = x.shape
    L = len(readout_ws)
    out_dim = readout_ws[-1].shape[1]
    out_dtype = x.dtype if out_dtype is None else out_dtype

    # ---- host-side parameter prep (glue, not compute) ----
    wp = (w_pool / N).astype(compute_dtype)        # fold the 1/N pooling scale

    padded_ws, padded_bs = [], []
    prev_out_pad = None
    for i, (w, bvec) in enumerate(zip(readout_ws, readout_bs)):
        n_in, n_out = w.shape
        last = (i == L - 1)
        # Hidden layers: lane-dense (pad out-dim to 128).  Final layer keeps its
        # true width so the output store/epilogue is not 16x amplified.
        n_out_pad = n_out if last else _round_up(n_out, 128)
        n_in_pad = n_in if i == 0 else prev_out_pad
        w_p = jnp.zeros((n_in_pad, n_out_pad), jnp.float32).at[:n_in, :n_out].set(w)
        b_p = jnp.zeros((1, n_out_pad), jnp.float32).at[0, :n_out].set(bvec)
        padded_ws.append(w_p.astype(compute_dtype))  # MXU operands (bf16 by default)
        padded_bs.append(b_p)                        # biases stay f32 (VPU add)
        prev_out_pad = n_out_pad

    # Split the first readout weight into pooled / local halves on the host
    # (avoids the lane-dim concat entirely).
    w0p = padded_ws[0][:F, :]
    w0l = padded_ws[0][F:, :]

    # Half-width activation slab: the only per-step HBM read that scales.
    x_in = x.astype(compute_dtype) if x.dtype != compute_dtype else x

    # ---- per-generation sizing ----
    vmem_cap = _vmem_capacity_bytes()
    vmem_limit = max(32 * 1024 * 1024,
                     min(int(0.75 * vmem_cap), 100 * 1024 * 1024))
    max_h = max(max(w.shape[1] for w in padded_ws), F)
    if batch_tile is None:
        batch_tile = _choose_batch_tile(
            B, N, F, max_h, jnp.dtype(compute_dtype).itemsize,
            budget_bytes=vmem_limit // 2, min_steps=_min_grid_steps())
    assert B % batch_tile == 0

    # ---- cost estimate (lets XLA overlap surrounding ops) ----
    flops = 2 * B * F * F                              # pooled Linear
    flops += 2 * B * F * padded_ws[0].shape[1]         # pooled half of layer 0
    flops += 2 * B * N * F * padded_ws[0].shape[1]     # local half of layer 0
    for w in padded_ws[1:]:
        flops += 2 * B * N * w.shape[0] * w.shape[1]
    weight_arrays = [wp, w0p, w0l] + padded_ws[1:] + padded_bs
    bytes_accessed = (x_in.size * jnp.dtype(x_in.dtype).itemsize
                      + B * N * out_dim * jnp.dtype(out_dtype).itemsize
                      + sum(a.size * jnp.dtype(a.dtype).itemsize for a in weight_arrays))
    cost = pl.CostEstimate(flops=int(flops), transcendentals=0,
                           bytes_accessed=int(bytes_accessed))

    # ---- build the pallas_call ----
    args = [x_in, wp, w0p, w0l, padded_bs[0]]
    for w, b2 in zip(padded_ws[1:], padded_bs[1:]):
        args += [w, b2]

    kernel = make_readout_kernel(L, compute_dtype)

    def build(single_buffer):
        def const_spec(shape):
            # Grid-invariant operand: index_map is constant over the batch grid,
            # so a single VMEM buffer is enough (default would double-buffer).
            imap = lambda b: (0, 0)
            if single_buffer:
                return pl.BlockSpec(shape, imap, pipeline_mode=pl.Buffered(1))
            return pl.BlockSpec(shape, imap)

        in_specs = [
            pl.BlockSpec((batch_tile, N, F), lambda b: (b, 0, 0)),   # activations
            const_spec(wp.shape),
            const_spec(w0p.shape),
            const_spec(w0l.shape),
            const_spec(padded_bs[0].shape),
        ]
        for w, b2 in zip(padded_ws[1:], padded_bs[1:]):
            in_specs.append(const_spec(w.shape))
            in_specs.append(const_spec(b2.shape))

        return pl.pallas_call(
            kernel,
            out_shape=jax.ShapeDtypeStruct((B, N, out_dim), out_dtype),
            grid=(B // batch_tile,),
            in_specs=in_specs,
            out_specs=pl.BlockSpec((batch_tile, N, out_dim), lambda b: (b, 0, 0)),
            compiler_params=pltpu.CompilerParams(
                dimension_semantics=("parallel",),
                vmem_limit_bytes=vmem_limit,
            ),
            cost_estimate=cost,
        )

    try:
        out = build(single_buffer_weights)(*args)
        return jax.block_until_ready(out)
    except Exception:
        # pipeline_mode=pl.Buffered(1) unsupported on this JAX/Mosaic version:
        # rebuild with default double-buffered weight specs (correctness identical).
        if not single_buffer_weights:
            raise
        out = build(False)(*args)
        return jax.block_until_ready(out)


# ------------------------------- reference ----------------------------------

def readout_reference(x, w_pool, readout_ws, readout_bs):
    """Pure-JAX reference, line-for-line with the PyTorch module."""
    B, N, F = x.shape
    f_local = x
    h_pooled = (x.sum(axis=1) / N) @ w_pool                       # (B, F)
    f_pooled = jnp.broadcast_to(h_pooled[:, None, :], x.shape)    # repeat+view
    feats = jax.nn.relu(jnp.concatenate([f_pooled, f_local], axis=-1))
    for i, (w, b) in enumerate(zip(readout_ws, readout_bs)):
        feats = feats @ w + b
        if i < len(readout_ws) - 1:
            feats = jax.nn.relu(feats)
    return feats


# --------------------------------- demo --------------------------------------

if __name__ == "__main__":
    # Small, module-consistent shapes.
    B, N, F = 2, 8, 32          # batch, nodes, n_features
    n_hid = [64]                # one hidden readout layer
    output_dim = 8

    key = jax.random.PRNGKey(0)
    k_x, k_wp, *k_layers = jax.random.split(key, 2 + (len(n_hid) + 1))

    x = jax.random.normal(k_x, (B, N, F), dtype=jnp.float32)

    # layer_pooled: Linear(F, F, bias=False)  -> weight stored as (in, out)
    w_pool = 0.1 * jax.random.normal(k_wp, (F, F), dtype=jnp.float32)

    # readout layers: dims [2F] + n_hid + [output_dim], bias_readout=True
    dims = [2 * F] + list(n_hid) + [output_dim]
    readout_ws, readout_bs = [], []
    for idx, (n_in, n_out) in enumerate(zip(dims, dims[1:])):
        kw, kb = jax.random.split(k_layers[idx])
        readout_ws.append(0.1 * jax.random.normal(kw, (n_in, n_out), dtype=jnp.float32))
        readout_bs.append(0.1 * jax.random.normal(kb, (n_out,), dtype=jnp.float32))

    ref = readout_reference(x, w_pool, readout_ws, readout_bs)

    # Default path (bf16 MXU operands + bf16 activation slab, f32 accumulation,
    # f32 output): recommended on v6e/v7x; looser tolerance for bf16 rounding.
    out = readout_forward(x, w_pool, readout_ws, readout_bs)
    out = jax.block_until_ready(out)
    assert out.shape == (B, N, output_dim)
    assert out.dtype == x.dtype
    assert jnp.allclose(out, ref, atol=5e-2, rtol=5e-2)

    # f32-operand path (use on v5e or when matmul exactness matters): tight
    # tolerance vs. the pure-JAX reference.
    out_f32 = readout_forward(x, w_pool, readout_ws, readout_bs,
                              compute_dtype=jnp.float32)
    out_f32 = jax.block_until_ready(out_f32)
    assert out_f32.shape == (B, N, output_dim)
    assert jnp.allclose(out_f32, ref, atol=1e-5, rtol=1e-5)

    print("KERNEL_OK")
</pallas_src>

<mosaic_0001>
module attributes {stable_mosaic.version = 11 : i64} {
  func.func @kernel(%arg0: i32, %arg1: memref<2x8x32xbf16, #tpu.memory_space<vmem>>, %arg2: memref<32x32xbf16, #tpu.memory_space<vmem>>, %arg3: memref<32x128xbf16, #tpu.memory_space<vmem>>, %arg4: memref<32x128xbf16, #tpu.memory_space<vmem>>, %arg5: memref<1x128xf32, #tpu.memory_space<vmem>>, %arg6: memref<128x8xbf16, #tpu.memory_space<vmem>>, %arg7: memref<1x8xf32, #tpu.memory_space<vmem>>, %arg8: memref<2x8x8xf32, #tpu.memory_space<vmem>>) attributes {dimension_semantics = [#tpu.dimension_semantics<parallel>], iteration_bounds = array<i64: 1>, scalar_prefetch = 0 : i64, scratch_operands = 0 : i64, tpu.core_type = #tpu.core_type<tc>, window_params = [{transform_indices = @transform_0, window_bounds = array<i64: 2, 8, 32>}, {pipeline_mode = #tpu.pipeline_mode<synchronous>, transform_indices = @transform_1, window_bounds = array<i64: 32, 32>}, {pipeline_mode = #tpu.pipeline_mode<synchronous>, transform_indices = @transform_2, window_bounds = array<i64: 32, 128>}, {pipeline_mode = #tpu.pipeline_mode<synchronous>, transform_indices = @transform_3, window_bounds = array<i64: 32, 128>}, {pipeline_mode = #tpu.pipeline_mode<synchronous>, transform_indices = @transform_4, window_bounds = array<i64: 1, 128>}, {pipeline_mode = #tpu.pipeline_mode<synchronous>, transform_indices = @transform_5, window_bounds = array<i64: 128, 8>}, {pipeline_mode = #tpu.pipeline_mode<synchronous>, transform_indices = @transform_6, window_bounds = array<i64: 1, 8>}, {transform_indices = @transform_7, window_bounds = array<i64: 2, 8, 8>}]} {
    %c0 = arith.constant 0 : index
    %c0_0 = arith.constant 0 : index
    %c0_1 = arith.constant 0 : index
    %0 = vector.load %arg1[%c0, %c0_0, %c0_1] : memref<2x8x32xbf16, #tpu.memory_space<vmem>>, vector<2x8x32xbf16>
    %1 = arith.extf %0 : vector<2x8x32xbf16> to vector<2x8x32xf32>
    %cst = arith.constant dense<0.000000e+00> : vector<2x32xf32>
    %2 = vector.multi_reduction <add>, %1, %cst [1] : vector<2x8x32xf32> to vector<2x32xf32>
    %3 = arith.truncf %2 : vector<2x32xf32> to vector<2x32xbf16>
    %c0_2 = arith.constant 0 : index
    %c0_3 = arith.constant 0 : index
    %4 = vector.load %arg2[%c0_2, %c0_3] : memref<32x32xbf16, #tpu.memory_space<vmem>>, vector<32x32xbf16>
    %cst_4 = arith.constant dense<0.000000e+00> : vector<2x32xf32>
    %5 = tpu.matmul %3, %4, %cst_4 {dimension_numbers = #tpu.dot_dimension_numbers<[1], [0], [0], [1], [0, 0, 1, 1], [], []>} : vector<2x32xbf16>, vector<32x32xbf16>, vector<2x32xf32> -> vector<2x32xf32>
    %cst_5 = arith.constant 0.000000e+00 : f32
    %6 = vector.broadcast %cst_5 : f32 to vector<2x32xf32>
    %7 = arith.maximumf %5, %6 : vector<2x32xf32>
    %8 = arith.truncf %7 : vector<2x32xf32> to vector<2x32xbf16>
    %c0_6 = arith.constant 0 : index
    %c0_7 = arith.constant 0 : index
    %9 = vector.load %arg3[%c0_6, %c0_7] : memref<32x128xbf16, #tpu.memory_space<vmem>>, vector<32x128xbf16>
    %cst_8 = arith.constant dense<0.000000e+00> : vector<2x128xf32>
    %10 = tpu.matmul %8, %9, %cst_8 {dimension_numbers = #tpu.dot_dimension_numbers<[1], [0], [0], [1], [0, 0, 1, 1], [], []>} : vector<2x32xbf16>, vector<32x128xbf16>, vector<2x128xf32> -> vector<2x128xf32>
    %cst_9 = arith.constant 0.000000e+00 : bf16
    %11 = vector.broadcast %cst_9 : bf16 to vector<2x8x32xbf16>
    %12 = arith.maximumf %0, %11 : vector<2x8x32xbf16>
    %13 = vector.shape_cast %12 : vector<2x8x32xbf16> to vector<16x32xbf16>
    %c0_10 = arith.constant 0 : index
    %c0_11 = arith.constant 0 : index
    %14 = vector.load %arg4[%c0_10, %c0_11] : memref<32x128xbf16, #tpu.memory_space<vmem>>, vector<32x128xbf16>
    %cst_12 = arith.constant dense<0.000000e+00> : vector<16x128xf32>
    %15 = tpu.matmul %13, %14, %cst_12 {dimension_numbers = #tpu.dot_dimension_numbers<[1], [0], [0], [1], [0, 0, 1, 1], [], []>} : vector<16x32xbf16>, vector<32x128xbf16>, vector<16x128xf32> -> vector<16x128xf32>
    %16 = vector.shape_cast %15 : vector<16x128xf32> to vector<2x8x128xf32>
    %17 = vector.shape_cast %10 : vector<2x128xf32> to vector<2x1x128xf32>
    %18 = vector.broadcast %17 : vector<2x1x128xf32> to vector<2x8x128xf32>
    %19 = arith.addf %16, %18 : vector<2x8x128xf32>
    %c0_13 = arith.constant 0 : index
    %c0_14 = arith.constant 0 : index
    %20 = vector.load %arg5[%c0_13, %c0_14] : memref<1x128xf32, #tpu.memory_space<vmem>>, vector<1x128xf32>
    %21 = vector.shape_cast %20 : vector<1x128xf32> to vector<1x1x128xf32>
    %22 = vector.broadcast %21 : vector<1x1x128xf32> to vector<2x8x128xf32>
    %23 = arith.addf %19, %22 : vector<2x8x128xf32>
    %24 = vector.shape_cast %23 : vector<2x8x128xf32> to vector<16x128xf32>
    %25 = arith.truncf %24 : vector<16x128xf32> to vector<16x128xbf16>
    %cst_15 = arith.constant 0.000000e+00 : bf16
    %26 = vector.broadcast %cst_15 : bf16 to vector<16x128xbf16>
    %27 = arith.maximumf %25, %26 : vector<16x128xbf16>
    %c0_16 = arith.constant 0 : index
    %c0_17 = arith.constant 0 : index
    %28 = vector.load %arg6[%c0_16, %c0_17] : memref<128x8xbf16, #tpu.memory_space<vmem>>, vector<128x8xbf16>
    %c0_18 = arith.constant 0 : index
    %c0_19 = arith.constant 0 : index
    %29 = vector.load %arg7[%c0_18, %c0_19] : memref<1x8xf32, #tpu.memory_space<vmem>>, vector<1x8xf32>
    %cst_20 = arith.constant dense<0.000000e+00> : vector<16x8xf32>
    %30 = tpu.matmul %27, %28, %cst_20 {dimension_numbers = #tpu.dot_dimension_numbers<[1], [0], [0], [1], [0, 0, 1, 1], [], []>} : vector<16x128xbf16>, vector<128x8xbf16>, vector<16x8xf32> -> vector<16x8xf32>
    %31 = vector.broadcast %29 : vector<1x8xf32> to vector<16x8xf32>
    %32 = arith.addf %30, %31 : vector<16x8xf32>
    %33 = vector.shape_cast %32 : vector<16x8xf32> to vector<2x8x8xf32>
    %c0_21 = arith.constant 0 : index
    %c0_22 = arith.constant 0 : index
    %c0_23 = arith.constant 0 : index
    %34 = vector.load %arg8[%c0_21, %c0_22, %c0_23] : memref<2x8x8xf32, #tpu.memory_space<vmem>>, vector<2x8x8xf32>
    tpu.vector_store %arg8[%c0_21, %c0_22, %c0_23], %33 {strides = array<i32>} : memref<2x8x8xf32, #tpu.memory_space<vmem>>, vector<2x8x8xf32>,
    return
  }
  func.func @transform_0(%arg0: i32) -> (i32, i32, i32) {
    %c0_i32 = arith.constant 0 : i32
    %c0_i32_0 = arith.constant 0 : i32
    %c0_i32_1 = arith.constant 0 : i32
    return %arg0, %c0_i32, %c0_i32_0 : i32, i32, i32
  }
  func.func @transform_1(%arg0: i32) -> (i32, i32) {
    %c0_i32 = arith.constant 0 : i32
    %c0_i32_0 = arith.constant 0 : i32
    %c0_i32_1 = arith.constant 0 : i32
    return %c0_i32, %c0_i32_0 : i32, i32
  }
  func.func @transform_2(%arg0: i32) -> (i32, i32) {
    %c0_i32 = arith.constant 0 : i32
    %c0_i32_0 = arith.constant 0 : i32
    %c0_i32_1 = arith.constant 0 : i32
    return %c0_i32, %c0_i32_0 : i32, i32
  }
  func.func @transform_3(%arg0: i32) -> (i32, i32) {
    %c0_i32 = arith.constant 0 : i32
    %c0_i32_0 = arith.constant 0 : i32
    %c0_i32_1 = arith.constant 0 : i32
    return %c0_i32, %c0_i32_0 : i32, i32
  }
  func.func @transform_4(%arg0: i32) -> (i32, i32) {
    %c0_i32 = arith.constant 0 : i32
    %c0_i32_0 = arith.constant 0 : i32
    %c0_i32_1 = arith.constant 0 : i32
    return %c0_i32, %c0_i32_0 : i32, i32
  }
  func.func @transform_5(%arg0: i32) -> (i32, i32) {
    %c0_i32 = arith.constant 0 : i32
    %c0_i32_0 = arith.constant 0 : i32
    %c0_i32_1 = arith.constant 0 : i32
    return %c0_i32, %c0_i32_0 : i32, i32
  }
  func.func @transform_6(%arg0: i32) -> (i32, i32) {
    %c0_i32 = arith.constant 0 : i32
    %c0_i32_0 = arith.constant 0 : i32
    %c0_i32_1 = arith.constant 0 : i32
    return %c0_i32, %c0_i32_0 : i32, i32
  }
  func.func @transform_7(%arg0: i32) -> (i32, i32, i32) {
    %c0_i32 = arith.constant 0 : i32
    %c0_i32_0 = arith.constant 0 : i32
    %c0_i32_1 = arith.constant 0 : i32
    return %arg0, %c0_i32, %c0_i32_0 : i32, i32, i32
  }
}

module attributes {stable_mosaic.version = 11 : i64} {
  func.func @kernel(%arg0: i32, %arg1: memref<2x8x32xbf16, #tpu.memory_space<vmem>>, %arg2: memref<32x32xbf16, #tpu.memory_space<vmem>>, %arg3: memref<32x128xbf16, #tpu.memory_space<vmem>>, %arg4: memref<32x128xbf16, #tpu.memory_space<vmem>>, %arg5: memref<1x128xf32, #tpu.memory_space<vmem>>, %arg6: memref<128x8xbf16, #tpu.memory_space<vmem>>, %arg7: memref<1x8xf32, #tpu.memory_space<vmem>>, %arg8: memref<2x8x8xf32, #tpu.memory_space<vmem>>) attributes {dimension_semantics = [#tpu.dimension_semantics<parallel>], iteration_bounds = array<i64: 1>, scalar_prefetch = 0 : i64, scratch_operands = 0 : i64, tpu.core_type = #tpu.core_type<tc>, window_params = [{transform_indices = @transform_0, window_bounds = array<i64: 2, 8, 32>}, {pipeline_mode = #tpu.pipeline_mode<synchronous>, transform_indices = @transform_1, window_bounds = array<i64: 32, 32>}, {pipeline_mode = #tpu.pipeline_mode<synchronous>, transform_indices = @transform_2, window_bounds = array<i64: 32, 128>}, {pipeline_mode = #tpu.pipeline_mode<synchronous>, transform_indices = @transform_3, window_bounds = array<i64: 32, 128>}, {pipeline_mode = #tpu.pipeline_mode<synchronous>, transform_indices = @transform_4, window_bounds = array<i64: 1, 128>}, {pipeline_mode = #tpu.pipeline_mode<synchronous>, transform_indices = @transform_5, window_bounds = array<i64: 128, 8>}, {pipeline_mode = #tpu.pipeline_mode<synchronous>, transform_indices = @transform_6, window_bounds = array<i64: 1, 8>}, {transform_indices = @transform_7, window_bounds = array<i64: 2, 8, 8>}]} {
    %c0 = arith.constant 0 : index
    %c0_0 = arith.constant 0 : index
    %c0_1 = arith.constant 0 : index
    %0 = vector.load %arg1[%c0, %c0_0, %c0_1] : memref<2x8x32xbf16, #tpu.memory_space<vmem>>, vector<2x8x32xbf16>
    %1 = arith.extf %0 : vector<2x8x32xbf16> to vector<2x8x32xf32>
    %cst = arith.constant dense<0.000000e+00> : vector<2x32xf32>
    %2 = vector.multi_reduction <add>, %1, %cst [1] : vector<2x8x32xf32> to vector<2x32xf32>
    %3 = arith.truncf %2 : vector<2x32xf32> to vector<2x32xbf16>
    %c0_2 = arith.constant 0 : index
    %c0_3 = arith.constant 0 : index
    %4 = vector.load %arg2[%c0_2, %c0_3] : memref<32x32xbf16, #tpu.memory_space<vmem>>, vector<32x32xbf16>
    %cst_4 = arith.constant dense<0.000000e+00> : vector<2x32xf32>
    %5 = tpu.matmul %3, %4, %cst_4 {dimension_numbers = #tpu.dot_dimension_numbers<[1], [0], [0], [1], [0, 0, 1, 1], [], []>} : vector<2x32xbf16>, vector<32x32xbf16>, vector<2x32xf32> -> vector<2x32xf32>
    %cst_5 = arith.constant 0.000000e+00 : f32
    %6 = vector.broadcast %cst_5 : f32 to vector<2x32xf32>
    %7 = arith.maximumf %5, %6 : vector<2x32xf32>
    %8 = arith.truncf %7 : vector<2x32xf32> to vector<2x32xbf16>
    %c0_6 = arith.constant 0 : index
    %c0_7 = arith.constant 0 : index
    %9 = vector.load %arg3[%c0_6, %c0_7] : memref<32x128xbf16, #tpu.memory_space<vmem>>, vector<32x128xbf16>
    %cst_8 = arith.constant dense<0.000000e+00> : vector<2x128xf32>
    %10 = tpu.matmul %8, %9, %cst_8 {dimension_numbers = #tpu.dot_dimension_numbers<[1], [0], [0], [1], [0, 0, 1, 1], [], []>} : vector<2x32xbf16>, vector<32x128xbf16>, vector<2x128xf32> -> vector<2x128xf32>
    %cst_9 = arith.constant 0.000000e+00 : bf16
    %11 = vector.broadcast %cst_9 : bf16 to vector<2x8x32xbf16>
    %12 = arith.maximumf %0, %11 : vector<2x8x32xbf16>
    %13 = vector.shape_cast %12 : vector<2x8x32xbf16> to vector<16x32xbf16>
    %c0_10 = arith.constant 0 : index
    %c0_11 = arith.constant 0 : index
    %14 = vector.load %arg4[%c0_10, %c0_11] : memref<32x128xbf16, #tpu.memory_space<vmem>>, vector<32x128xbf16>
    %cst_12 = arith.constant dense<0.000000e+00> : vector<16x128xf32>
    %15 = tpu.matmul %13, %14, %cst_12 {dimension_numbers = #tpu.dot_dimension_numbers<[1], [0], [0], [1], [0, 0, 1, 1], [], []>} : vector<16x32xbf16>, vector<32x128xbf16>, vector<16x128xf32> -> vector<16x128xf32>
    %16 = vector.shape_cast %15 : vector<16x128xf32> to vector<2x8x128xf32>
    %17 = vector.shape_cast %10 : vector<2x128xf32> to vector<2x1x128xf32>
    %18 = vector.broadcast %17 : vector<2x1x128xf32> to vector<2x8x128xf32>
    %19 = arith.addf %16, %18 : vector<2x8x128xf32>
    %c0_13 = arith.constant 0 : index
    %c0_14 = arith.constant 0 : index
    %20 = vector.load %arg5[%c0_13, %c0_14] : memref<1x128xf32, #tpu.memory_space<vmem>>, vector<1x128xf32>
    %21 = vector.shape_cast %20 : vector<1x128xf32> to vector<1x1x128xf32>
    %22 = vector.broadcast %21 : vector<1x1x128xf32> to vector<2x8x128xf32>
    %23 = arith.addf %19, %22 : vector<2x8x128xf32>
    %24 = vector.shape_cast %23 : vector<2x8x128xf32> to vector<16x128xf32>
    %25 = arith.truncf %24 : vector<16x128xf32> to vector<16x128xbf16>
    %cst_15 = arith.constant 0.000000e+00 : bf16
    %26 = vector.broadcast %cst_15 : bf16 to vector<16x128xbf16>
    %27 = arith.maximumf %25, %26 : vector<16x128xbf16>
    %c0_16 = arith.constant 0 : index
    %c0_17 = arith.constant 0 : index
    %28 = vector.load %arg6[%c0_16, %c0_17] : memref<128x8xbf16, #tpu.memory_space<vmem>>, vector<128x8xbf16>
    %c0_18 = arith.constant 0 : index
    %c0_19 = arith.constant 0 : index
    %29 = vector.load %arg7[%c0_18, %c0_19] : memref<1x8xf32, #tpu.memory_space<vmem>>, vector<1x8xf32>
    %cst_20 = arith.constant dense<0.000000e+00> : vector<16x8xf32>
    %30 = tpu.matmul %27, %28, %cst_20 {dimension_numbers = #tpu.dot_dimension_numbers<[1], [0], [0], [1], [0, 0, 1, 1], [], []>} : vector<16x128xbf16>, vector<128x8xbf16>, vector<16x8xf32> -> vector<16x8xf32>
    %31 = vector.broadcast %29 : vector<1x8xf32> to vector<16x8xf32>
    %32 = arith.addf %30, %31 : vector<16x8xf32>
    %33 = vector.shape_cast %32 : vector<16x8xf32> to vector<2x8x8xf32>
    %c0_21 = arith.constant 0 : index
    %c0_22 = arith.constant 0 : index
    %c0_23 = arith.constant 0 : index
    %34 = vector.load %arg8[%c0_21, %c0_22, %c0_23] : memref<2x8x8xf32, #tpu.memory_space<vmem>>, vector<2x8x8xf32>
    tpu.vector_store %arg8[%c0_21, %c0_22, %c0_23], %33 {strides = array<i32>} : memref<2x8x8xf32, #tpu.memory_space<vmem>>, vector<2x8x8xf32>,
    return
  }
  func.func @transform_0(%arg0: i32) -> (i32, i32, i32) {
    %c0_i32 = arith.constant 0 : i32
    %c0_i32_0 = arith.constant 0 : i32
    %c0_i32_1 = arith.constant 0 : i32
    return %arg0, %c0_i32, %c0_i32_0 : i32, i32, i32
  }
  func.func @transform_1(%arg0: i32) -> (i32, i32) {
    %c0_i32 = arith.constant 0 : i32
    %c0_i32_0 = arith.constant 0 : i32
    %c0_i32_1 = arith.constant 0 : i32
    return %c0_i32, %c0_i32_0 : i32, i32
  }
  func.func @transform_2(%arg0: i32) -> (i32, i32) {
    %c0_i32 = arith.constant 0 : i32
    %c0_i32_0 = arith.constant 0 : i32
    %c0_i32_1 = arith.constant 0 : i32
    return %c0_i32, %c0_i32_0 : i32, i32
  }
  func.func @transform_3(%arg0: i32) -> (i32, i32) {
    %c0_i32 = arith.constant 0 : i32
    %c0_i32_0 = arith.constant 0 : i32
    %c0_i32_1 = arith.constant 0 : i32
    return %c0_i32, %c0_i32_0 : i32, i32
  }
  func.func @transform_4(%arg0: i32) -> (i32, i32) {
    %c0_i32 = arith.constant 0 : i32
    %c0_i32_0 = arith.constant 0 : i32
    %c0_i32_1 = arith.constant 0 : i32
    return %c0_i32, %c0_i32_0 : i32, i32
  }
  func.func @transform_5(%arg0: i32) -> (i32, i32) {
    %c0_i32 = arith.constant 0 : i32
    %c0_i32_0 = arith.constant 0 : i32
    %c0_i32_1 = arith.constant 0 : i32
    return %c0_i32, %c0_i32_0 : i32, i32
  }
  func.func @transform_6(%arg0: i32) -> (i32, i32) {
    %c0_i32 = arith.constant 0 : i32
    %c0_i32_0 = arith.constant 0 : i32
    %c0_i32_1 = arith.constant 0 : i32
    return %c0_i32, %c0_i32_0 : i32, i32
  }
  func.func @transform_7(%arg0: i32) -> (i32, i32, i32) {
    %c0_i32 = arith.constant 0 : i32
    %c0_i32_0 = arith.constant 0 : i32
    %c0_i32_1 = arith.constant 0 : i32
    return %arg0, %c0_i32, %c0_i32_0 : i32, i32, i32
  }
}

</mosaic_0001>

<llo_original>
// kernel: tpu_custom_call.1
$region0: #{tpu_custom_call.1}
  #allocation0 [shape = 'u32[]', space=smem, size = 0x4, offset = 0x4, fixed_abs, tag = 'smem constant byte address 0x4 - core index']
  #allocation1 [shape = 'u32[72,128]{1,0:T(1,128)}', space=vmem, size = 0x9000, scoped, tag = 'internal scratch']
  %s0 = inlined_call_operand.vmem [shape: bf16[2,8,32], index: 0, kind: input, shape index: {}]
  %s1 = inlined_call_operand.vmem [shape: bf16[32,32], index: 1, kind: input, shape index: {}]
  %s2 = inlined_call_operand.vmem [shape: bf16[32,128], index: 2, kind: input, shape index: {}]
  %s3 = inlined_call_operand.vmem [shape: bf16[32,128], index: 3, kind: input, shape index: {}]
  %s4 = inlined_call_operand.vmem [shape: f32[1,128], index: 4, kind: input, shape index: {}]
  %s5 = inlined_call_operand.vmem [shape: bf16[128,8], index: 5, kind: input, shape index: {}]
  %s6 = inlined_call_operand.vmem [shape: f32[1,8], index: 6, kind: input, shape index: {}]
  %s7 = inlined_call_operand.hbm [shape: f32[2,8,8], index: 7, kind: output, shape index: {}]
  %s8 = sld [smem:[#allocation0]]
  $region38: #{tpu_custom_call.1} parent=0
    _
  %s10 = ssub.s32 1, %s8
  %s11 = scalar_select 0, %s10, %s8
  $region1: #{tpu_custom_call.1} parent=0
    #allocation2 [shape = 'u8[8192]{0}', space=vmem, size = 0x2000, scoped, tag = 'output window, operand 0, single buffered']
    #allocation3 [shape = 's32[1]{0}', space=sflag, size = 0x4, scoped, tag = 'scoped memory for tpu_custom_call.1']
    %12 = vsyncpa [#allocation3], 0
    // Predicated region
    $region2: #{tpu_custom_call.1} parent=1 // pred_check
      _
    $region3: #{tpu_custom_call.1} parent=1 // pred_check_branch
      %14 = sbr.rel (0) target = $region5
    $region4: #{tpu_custom_call.1} parent=1 // pred_region
      _
    $region5: #{tpu_custom_call.1} parent=1 // pred_fallthru
      _
    // Predicated region
    $region6: #{tpu_custom_call.1} parent=1 // pred_check
      _
    $region7: #{tpu_custom_call.1} parent=1 // pred_check_branch
      %16 = sbr.rel (0) target = $region9
    $region8: #{tpu_custom_call.1} parent=1 // pred_region
      _
    $region9: #{tpu_custom_call.1} parent=1 // pred_fallthru
      _
    // Predicated region
    $region10: #{tpu_custom_call.1} parent=1 // pred_check
      _
    $region11: #{tpu_custom_call.1} parent=1 // pred_check_branch
      %18 = sbr.rel (0) target = $region13
    $region12: #{tpu_custom_call.1} parent=1 // pred_region
      _
    $region13: #{tpu_custom_call.1} parent=1 // pred_fallthru
      _
    // Predicated region
    $region14: #{tpu_custom_call.1} parent=1 // pred_check
      _
    $region15: #{tpu_custom_call.1} parent=1 // pred_check_branch
      %20 = sbr.rel (0) target = $region17
    $region16: #{tpu_custom_call.1} parent=1 // pred_region
      _
    $region17: #{tpu_custom_call.1} parent=1 // pred_fallthru
      _
    // Predicated region
    $region18: #{tpu_custom_call.1} parent=1 // pred_check
      _
    $region19: #{tpu_custom_call.1} parent=1 // pred_check_branch
      %22 = sbr.rel (0) target = $region21
    $region20: #{tpu_custom_call.1} parent=1 // pred_region
      _
    $region21: #{tpu_custom_call.1} parent=1 // pred_fallthru
      _
    // Predicated region
    $region22: #{tpu_custom_call.1} parent=1 // pred_check
      _
    $region23: #{tpu_custom_call.1} parent=1 // pred_check_branch
      %24 = sbr.rel (0) target = $region25
    $region24: #{tpu_custom_call.1} parent=1 // pred_region
      _
    $region25: #{tpu_custom_call.1} parent=1 // pred_fallthru
      _
    // Predicated region
    $region26: #{tpu_custom_call.1} parent=1 // pred_check
      _
    $region27: #{tpu_custom_call.1} parent=1 // pred_check_branch
      %26 = sbr.rel (0) target = $region29
    $region28: #{tpu_custom_call.1} parent=1 // pred_region
      _
    $region29: #{tpu_custom_call.1} parent=1 // pred_fallthru
      _
    %v28 = vld [vmem:[%s0] sm:$0xf]
    %v29 = vld [vmem:[%s0 + $0x4] sm:$0xf]
    %v30 = vunpack.c.l.bf16 %v28
    %v31 = vunpack.c.l.bf16 %v29
    %vm32 = vcmask 261120
    %v33 = vsel %vm32, %v30, 0.0
    %v34 = vrot.slane %v33, 4
    %v35 = vadd.f32 %v33, %v34
    %v36 = vrot.slane %v35, 2
    %v37 = vadd.f32 %v35, %v36
    %v38 = vrot.slane %v37, 1
    %v39 = vadd.f32 %v37, %v38
    %v40 = vsel %vm32, %v31, 0.0
    %v41 = vrot.slane %v40, 4
    %v42 = vadd.f32 %v40, %v41
    %v43 = vrot.slane %v42, 2
    %v44 = vadd.f32 %v42, %v43
    %v45 = vrot.slane %v44, 1
    %v46 = vadd.f32 %v44, %v45
    %v47 = vpack.c.bf16 %v39, %v39
    %v48 = vpack.c.bf16 %v46, %v46
    %v49 = vld [vmem:[%s1] sm:$0xf]
    %v50 = vld [vmem:[%s1 + $0x4] sm:$0xf]
    %v51 = vld [vmem:[%s1 + $0x8] sm:$0xf]
    %v52 = vld [vmem:[%s1 + $0xc] sm:$0xf]
    %v55 = vunpack.c.l.b16 %v47
    %v56 = vunpack.c.l.b16 %v48
    %vm57 = vcmask 1041409
    %v58 = vsel %vm57, %v56, %v55
    %v59 = vpack.c.b16 %v58, %v58
    %v64 = vunpack.c.l.b16 %v49
    %v65 = vunpack.c.l.b16 %v50
    %v66 = vunpack.c.l.b16 %v51
    %v67 = vunpack.c.l.b16 %v52
    %v68 = vpack.c.b16 %v65, %v64
    %v69 = vpack.c.b16 %v67, %v66
    %v73 = vsel %vm32, %v59, 0
    %75 = vmatpush.bf16.msra.mxu0 0
    %76 = vmatpush.bf16.msra.mxu0 0
    %77 = vmatpush.bf16.msra.mxu0 0
    %78 = vmatpush.bf16.msra.mxu0 0
    %79 = vmatpush.bf16.msra.mxu0 0
    %80 = vmatpush.bf16.msra.mxu0 0
    %81 = vmatpush.bf16.msra.mxu0 %v69
    %82 = vmatpush.bf16.msra.mxu0 %v68
    %83 = vmatmul.bf16.gmra.mxu0 %v73
    %v84 = vpop.f32.mrf.mxu0
    %v85 = vadd.f32 0.0, %v84
    %v86 = vpop.f32.mrf.mxu0
    %87 = vdwg.mxu0
    %v88 = vmax.f32 %v85, 0.0
    %v89 = vpack.c.bf16 %v88, %v88
    %v90 = vld [vmem:[%s2] sm:$0xf]
    %v91 = vld [vmem:[%s2 + $0x4] sm:$0xf]
    %v92 = vld [vmem:[%s2 + $0x8] sm:$0xf]
    %v93 = vld [vmem:[%s2 + $0xc] sm:$0xf]
    %v98 = vunpack.c.l.b16 %v90
    %v99 = vunpack.c.l.b16 %v91
    %v100 = vunpack.c.l.b16 %v92
    %v101 = vunpack.c.l.b16 %v93
    %v102 = vpack.c.b16 %v99, %v98
    %v103 = vpack.c.b16 %v101, %v100
    %v107 = vsel %vm32, %v89, 0
    %109 = vmatpush.bf16.msra.mxu0 0
    %110 = vmatpush.bf16.msra.mxu0 0
    %111 = vmatpush.bf16.msra.mxu0 0
    %112 = vmatpush.bf16.msra.mxu0 0
    %113 = vmatpush.bf16.msra.mxu0 0
    %114 = vmatpush.bf16.msra.mxu0 0
    %115 = vmatpush.bf16.msra.mxu0 %v103
    %116 = vmatpush.bf16.msra.mxu0 %v102
    %117 = vmatmul.bf16.gmra.mxu0 %v107
    %v118 = vpop.f32.mrf.mxu0
    %v119 = vadd.f32 0.0, %v118
    %v120 = vpop.f32.mrf.mxu0
    %121 = vdwg.mxu0
    %v122 = vmax.f32 %v30, 0.0
    %v123 = vmax.f32 %v31, 0.0
    %v124 = vpack.c.bf16 %v122, %v122
    %v125 = vpack.c.bf16 %v123, %v123
    %v126 = vld [vmem:[%s3] sm:$0xf]
    %v127 = vld [vmem:[%s3 + $0x4] sm:$0xf]
    %v128 = vld [vmem:[%s3 + $0x8] sm:$0xf]
    %v129 = vld [vmem:[%s3 + $0xc] sm:$0xf]
    %v132 = vunpack.c.l.b16 %v124
    %v133 = vunpack.c.l.b16 %v125
    %v134 = vpack.c.b16 %v133, %v132
    %v139 = vunpack.c.l.b16 %v126
    %v140 = vunpack.c.l.b16 %v127
    %v141 = vunpack.c.l.b16 %v128
    %v142 = vunpack.c.l.b16 %v129
    %v143 = vpack.c.b16 %v140, %v139
    %v144 = vpack.c.b16 %v142, %v141
    %v148 = vsel %vm32, %v134, 0
    %150 = vmatpush.bf16.msra.mxu0 0
    %151 = vmatpush.bf16.msra.mxu0 0
    %152 = vmatpush.bf16.msra.mxu0 0
    %153 = vmatpush.bf16.msra.mxu0 0
    %154 = vmatpush.bf16.msra.mxu0 0
    %155 = vmatpush.bf16.msra.mxu0 0
    %156 = vmatpush.bf16.msra.mxu0 %v144
    %157 = vmatpush.bf16.msra.mxu0 %v143
    %158 = vmatmul.bf16.gmra.mxu0 %v148
    %v159 = vpop.f32.mrf.mxu0
    %v160 = vadd.f32 0.0, %v159
    %v161 = vpop.f32.mrf.mxu0
    %v162 = vadd.f32 0.0, %v161
    %163 = vdwg.mxu0
    %v165 = vrot.slane %v119, 1
    %v166 = vperm.slane %v119, 0
    %v167 = vperm.slane %v165, 0
    %v170 = vadd.f32 %v160, %v166
    %v171 = vadd.f32 %v162, %v167
    %v172 = vld [vmem:[%s4] sm:$0x1]
    %v174 = vperm.slane %v172, 0
    %v176 = vadd.f32 %v170, %v174
    %v177 = vadd.f32 %v171, %v174
    %v178 = vpack.c.bf16 %v176, %v176
    %v179 = vpack.c.bf16 %v177, %v177
    %v180 = vunpack.c.l.bf16 %v178
    %v181 = vunpack.c.l.bf16 %v179
    %v182 = vmax.f32 %v180, 0.0
    %v183 = vmax.f32 %v181, 0.0
    %v184 = vpack.c.bf16 %v183, %v182
    %v185 = vld [vmem:[%s5] sm:$0xf]
    %v186 = vld [vmem:[%s5 + $0x4] sm:$0xf]
    %v187 = vld [vmem:[%s5 + $0x8] sm:$0xf]
    %v188 = vld [vmem:[%s5 + $0xc] sm:$0xf]
    %v189 = vld [vmem:[%s5 + $0x10] sm:$0xf]
    %v190 = vld [vmem:[%s5 + $0x14] sm:$0xf]
    %v191 = vld [vmem:[%s5 + $0x18] sm:$0xf]
    %v192 = vld [vmem:[%s5 + $0x1c] sm:$0xf]
    %v193 = vld [vmem:[%s5 + $0x20] sm:$0xf]
    %v194 = vld [vmem:[%s5 + $0x24] sm:$0xf]
    %v195 = vld [vmem:[%s5 + $0x28] sm:$0xf]
    %v196 = vld [vmem:[%s5 + $0x2c] sm:$0xf]
    %v197 = vld [vmem:[%s5 + $0x30] sm:$0xf]
    %v198 = vld [vmem:[%s5 + $0x34] sm:$0xf]
    %v199 = vld [vmem:[%s5 + $0x38] sm:$0xf]
    %v200 = vld [vmem:[%s5 + $0x3c] sm:$0xf]
    %v201 = vld [vmem:[%s6] sm:$0x1]
    %v203 = vperm.slane %v201, 0
    %v221 = vunpack.c.l.b16 %v185
    %v222 = vunpack.c.l.b16 %v186
    %v223 = vunpack.c.l.b16 %v187
    %v224 = vunpack.c.l.b16 %v188
    %v225 = vunpack.c.l.b16 %v189
    %v226 = vunpack.c.l.b16 %v190
    %v227 = vunpack.c.l.b16 %v191
    %v228 = vunpack.c.l.b16 %v192
    %v229 = vunpack.c.l.b16 %v193
    %v230 = vunpack.c.l.b16 %v194
    %v231 = vunpack.c.l.b16 %v195
    %v232 = vunpack.c.l.b16 %v196
    %v233 = vunpack.c.l.b16 %v197
    %v234 = vunpack.c.l.b16 %v198
    %v235 = vunpack.c.l.b16 %v199
    %v236 = vunpack.c.l.b16 %v200
    %v237 = vpack.c.b16 %v222, %v221
    %v238 = vpack.c.b16 %v224, %v223
    %v239 = vpack.c.b16 %v226, %v225
    %v240 = vpack.c.b16 %v228, %v227
    %v241 = vpack.c.b16 %v230, %v229
    %v242 = vpack.c.b16 %v232, %v231
    %v243 = vpack.c.b16 %v234, %v233
    %v244 = vpack.c.b16 %v236, %v235
    %253 = vmatpush.bf16.msra.mxu0 %v244
    %254 = vmatpush.bf16.msra.mxu0 %v243
    %255 = vmatpush.bf16.msra.mxu0 %v242
    %256 = vmatpush.bf16.msra.mxu0 %v241
    %257 = vmatpush.bf16.msra.mxu0 %v240
    %258 = vmatpush.bf16.msra.mxu0 %v239
    %259 = vmatpush.bf16.msra.mxu0 %v238
    %260 = vmatpush.bf16.msra.mxu0 %v237
    %261 = vmatmul.bf16.gmra.mxu0 %v184
    %v262 = vpop.f32.mrf.mxu0
    %v263 = vadd.f32 %v203, %v262
    %v264 = vpop.f32.mrf.mxu0
    %v265 = vadd.f32 %v203, %v264
    %266 = vdwg.mxu0
    %vm267 = vcmask 64512
    %268 = vst.msk [vmem:[#allocation2] sm:$0xff] %vm267, %v263
    %269 = vst.msk [vmem:[#allocation2 + $0x8] sm:$0xff] %vm267, %v265
    // Predicated region
    $region30: #{tpu_custom_call.1} parent=1 // pred_check
      _
    $region31: #{tpu_custom_call.1} parent=1 // pred_check_branch
      %271 = sbr.rel (0) target = $region33
    $region32: #{tpu_custom_call.1} parent=1 // pred_region
      %273 = vsyncadd [#allocation3], 0
      %s274 = sshll.u32 [#allocation2], 4
      %s275 = int_to_ptr.vmem [resolvable:$true] %s274
      %s276 = sshll.u32 %s7, 4
      %s277 = int_to_ptr.hbm [resolvable:$true] %s276
      %282 = dma.vmem_to_hbm [thread:$0]  %s275, 256, %s277, [#allocation3], 128, 128, 8
    $region33: #{tpu_custom_call.1} parent=1 // pred_fallthru
      _
    // Predicated region
    $region34: #{tpu_custom_call.1} parent=1 // pred_check
      _
    $region35: #{tpu_custom_call.1} parent=1 // pred_check_branch
      %284 = sbr.rel (0) target = $region37
    $region36: #{tpu_custom_call.1} parent=1 // pred_region
      %286 = dma.done [#allocation3], 256
    $region37: #{tpu_custom_call.1} parent=1 // pred_fallthru
      _
    %287 = vsyncpa [#allocation3], 1

// kernel: tpu_custom_call.1
$region0: #{tpu_custom_call.1}
  #allocation0 [shape = 'u32[]', space=smem, size = 0x4, offset = 0x4, fixed_abs, tag = 'smem constant byte address 0x4 - core index']
  #allocation1 [shape = 'u32[72,128]{1,0:T(1,128)}', space=vmem, size = 0x9000, scoped, tag = 'internal scratch']
  %s0 = inlined_call_operand.vmem [shape: bf16[2,8,32], index: 0, kind: input, shape index: {}]
  %s1 = inlined_call_operand.vmem [shape: bf16[32,32], index: 1, kind: input, shape index: {}]
  %s2 = inlined_call_operand.vmem [shape: bf16[32,128], index: 2, kind: input, shape index: {}]
  %s3 = inlined_call_operand.vmem [shape: bf16[32,128], index: 3, kind: input, shape index: {}]
  %s4 = inlined_call_operand.vmem [shape: f32[1,128], index: 4, kind: input, shape index: {}]
  %s5 = inlined_call_operand.vmem [shape: bf16[128,8], index: 5, kind: input, shape index: {}]
  %s6 = inlined_call_operand.vmem [shape: f32[1,8], index: 6, kind: input, shape index: {}]
  %s7 = inlined_call_operand.hbm [shape: f32[2,8,8], index: 7, kind: output, shape index: {}]
  %s8 = sld [smem:[#allocation0]]
  $region38: #{tpu_custom_call.1} parent=0
    _
  %s10 = ssub.s32 1, %s8
  %s11 = scalar_select 0, %s10, %s8
  $region1: #{tpu_custom_call.1} parent=0
    #allocation2 [shape = 'u8[8192]{0}', space=vmem, size = 0x2000, scoped, tag = 'output window, operand 0, single buffered']
    #allocation3 [shape = 's32[1]{0}', space=sflag, size = 0x4, scoped, tag = 'scoped memory for tpu_custom_call.1']
    %12 = vsyncpa [#allocation3], 0
    // Predicated region
    $region2: #{tpu_custom_call.1} parent=1 // pred_check
      _
    $region3: #{tpu_custom_call.1} parent=1 // pred_check_branch
      %14 = sbr.rel (0) target = $region5
    $region4: #{tpu_custom_call.1} parent=1 // pred_region
      _
    $region5: #{tpu_custom_call.1} parent=1 // pred_fallthru
      _
    // Predicated region
    $region6: #{tpu_custom_call.1} parent=1 // pred_check
      _
    $region7: #{tpu_custom_call.1} parent=1 // pred_check_branch
      %16 = sbr.rel (0) target = $region9
    $region8: #{tpu_custom_call.1} parent=1 // pred_region
      _
    $region9: #{tpu_custom_call.1} parent=1 // pred_fallthru
      _
    // Predicated region
    $region10: #{tpu_custom_call.1} parent=1 // pred_check
      _
    $region11: #{tpu_custom_call.1} parent=1 // pred_check_branch
      %18 = sbr.rel (0) target = $region13
    $region12: #{tpu_custom_call.1} parent=1 // pred_region
      _
    $region13: #{tpu_custom_call.1} parent=1 // pred_fallthru
      _
    // Predicated region
    $region14: #{tpu_custom_call.1} parent=1 // pred_check
      _
    $region15: #{tpu_custom_call.1} parent=1 // pred_check_branch
      %20 = sbr.rel (0) target = $region17
    $region16: #{tpu_custom_call.1} parent=1 // pred_region
      _
    $region17: #{tpu_custom_call.1} parent=1 // pred_fallthru
      _
    // Predicated region
    $region18: #{tpu_custom_call.1} parent=1 // pred_check
      _
    $region19: #{tpu_custom_call.1} parent=1 // pred_check_branch
      %22 = sbr.rel (0) target = $region21
    $region20: #{tpu_custom_call.1} parent=1 // pred_region
      _
    $region21: #{tpu_custom_call.1} parent=1 // pred_fallthru
      _
    // Predicated region
    $region22: #{tpu_custom_call.1} parent=1 // pred_check
      _
    $region23: #{tpu_custom_call.1} parent=1 // pred_check_branch
      %24 = sbr.rel (0) target = $region25
    $region24: #{tpu_custom_call.1} parent=1 // pred_region
      _
    $region25: #{tpu_custom_call.1} parent=1 // pred_fallthru
      _
    // Predicated region
    $region26: #{tpu_custom_call.1} parent=1 // pred_check
      _
    $region27: #{tpu_custom_call.1} parent=1 // pred_check_branch
      %26 = sbr.rel (0) target = $region29
    $region28: #{tpu_custom_call.1} parent=1 // pred_region
      _
    $region29: #{tpu_custom_call.1} parent=1 // pred_fallthru
      _
    %v28 = vld [vmem:[%s0] sm:$0xf]
    %v29 = vld [vmem:[%s0 + $0x4] sm:$0xf]
    %v30 = vunpack.c.l.bf16 %v28
    %v31 = vunpack.c.l.bf16 %v29
    %vm32 = vcmask 261120
    %v33 = vsel %vm32, %v30, 0.0
    %v34 = vrot.slane %v33, 4
    %v35 = vadd.f32 %v33, %v34
    %v36 = vrot.slane %v35, 2
    %v37 = vadd.f32 %v35, %v36
    %v38 = vrot.slane %v37, 1
    %v39 = vadd.f32 %v37, %v38
    %v40 = vsel %vm32, %v31, 0.0
    %v41 = vrot.slane %v40, 4
    %v42 = vadd.f32 %v40, %v41
    %v43 = vrot.slane %v42, 2
    %v44 = vadd.f32 %v42, %v43
    %v45 = vrot.slane %v44, 1
    %v46 = vadd.f32 %v44, %v45
    %v47 = vpack.c.bf16 %v39, %v39
    %v48 = vpack.c.bf16 %v46, %v46
    %v49 = vld [vmem:[%s1] sm:$0xf]
    %v50 = vld [vmem:[%s1 + $0x4] sm:$0xf]
    %v51 = vld [vmem:[%s1 + $0x8] sm:$0xf]
    %v52 = vld [vmem:[%s1 + $0xc] sm:$0xf]
    %v55 = vunpack.c.l.b16 %v47
    %v56 = vunpack.c.l.b16 %v48
    %vm57 = vcmask 1041409
    %v58 = vsel %vm57, %v56, %v55
    %v59 = vpack.c.b16 %v58, %v58
    %v64 = vunpack.c.l.b16 %v49
    %v65 = vunpack.c.l.b16 %v50
    %v66 = vunpack.c.l.b16 %v51
    %v67 = vunpack.c.l.b16 %v52
    %v68 = vpack.c.b16 %v65, %v64
    %v69 = vpack.c.b16 %v67, %v66
    %v73 = vsel %vm32, %v59, 0
    %75 = vmatpush.bf16.msra.mxu0 0
    %76 = vmatpush.bf16.msra.mxu0 0
    %77 = vmatpush.bf16.msra.mxu0 0
    %78 = vmatpush.bf16.msra.mxu0 0
    %79 = vmatpush.bf16.msra.mxu0 0
    %80 = vmatpush.bf16.msra.mxu0 0
    %81 = vmatpush.bf16.msra.mxu0 %v69
    %82 = vmatpush.bf16.msra.mxu0 %v68
    %83 = vmatmul.bf16.gmra.mxu0 %v73
    %v84 = vpop.f32.mrf.mxu0
    %v85 = vadd.f32 0.0, %v84
    %v86 = vpop.f32.mrf.mxu0
    %87 = vdwg.mxu0
    %v88 = vmax.f32 %v85, 0.0
    %v89 = vpack.c.bf16 %v88, %v88
    %v90 = vld [vmem:[%s2] sm:$0xf]
    %v91 = vld [vmem:[%s2 + $0x4] sm:$0xf]
    %v92 = vld [vmem:[%s2 + $0x8] sm:$0xf]
    %v93 = vld [vmem:[%s2 + $0xc] sm:$0xf]
    %v98 = vunpack.c.l.b16 %v90
    %v99 = vunpack.c.l.b16 %v91
    %v100 = vunpack.c.l.b16 %v92
    %v101 = vunpack.c.l.b16 %v93
    %v102 = vpack.c.b16 %v99, %v98
    %v103 = vpack.c.b16 %v101, %v100
    %v107 = vsel %vm32, %v89, 0
    %109 = vmatpush.bf16.msra.mxu0 0
    %110 = vmatpush.bf16.msra.mxu0 0
    %111 = vmatpush.bf16.msra.mxu0 0
    %112 = vmatpush.bf16.msra.mxu0 0
    %113 = vmatpush.bf16.msra.mxu0 0
    %114 = vmatpush.bf16.msra.mxu0 0
    %115 = vmatpush.bf16.msra.mxu0 %v103
    %116 = vmatpush.bf16.msra.mxu0 %v102
    %117 = vmatmul.bf16.gmra.mxu0 %v107
    %v118 = vpop.f32.mrf.mxu0
    %v119 = vadd.f32 0.0, %v118
    %v120 = vpop.f32.mrf.mxu0
    %121 = vdwg.mxu0
    %v122 = vmax.f32 %v30, 0.0
    %v123 = vmax.f32 %v31, 0.0
    %v124 = vpack.c.bf16 %v122, %v122
    %v125 = vpack.c.bf16 %v123, %v123
    %v126 = vld [vmem:[%s3] sm:$0xf]
    %v127 = vld [vmem:[%s3 + $0x4] sm:$0xf]
    %v128 = vld [vmem:[%s3 + $0x8] sm:$0xf]
    %v129 = vld [vmem:[%s3 + $0xc] sm:$0xf]
    %v132 = vunpack.c.l.b16 %v124
    %v133 = vunpack.c.l.b16 %v125
    %v134 = vpack.c.b16 %v133, %v132
    %v139 = vunpack.c.l.b16 %v126
    %v140 = vunpack.c.l.b16 %v127
    %v141 = vunpack.c.l.b16 %v128
    %v142 = vunpack.c.l.b16 %v129
    %v143 = vpack.c.b16 %v140, %v139
    %v144 = vpack.c.b16 %v142, %v141
    %v148 = vsel %vm32, %v134, 0
    %150 = vmatpush.bf16.msra.mxu0 0
    %151 = vmatpush.bf16.msra.mxu0 0
    %152 = vmatpush.bf16.msra.mxu0 0
    %153 = vmatpush.bf16.msra.mxu0 0
    %154 = vmatpush.bf16.msra.mxu0 0
    %155 = vmatpush.bf16.msra.mxu0 0
    %156 = vmatpush.bf16.msra.mxu0 %v144
    %157 = vmatpush.bf16.msra.mxu0 %v143
    %158 = vmatmul.bf16.gmra.mxu0 %v148
    %v159 = vpop.f32.mrf.mxu0
    %v160 = vadd.f32 0.0, %v159
    %v161 = vpop.f32.mrf.mxu0
    %v162 = vadd.f32 0.0, %v161
    %163 = vdwg.mxu0
    %v165 = vrot.slane %v119, 1
    %v166 = vperm.slane %v119, 0
    %v167 = vperm.slane %v165, 0
    %v170 = vadd.f32 %v160, %v166
    %v171 = vadd.f32 %v162, %v167
    %v172 = vld [vmem:[%s4] sm:$0x1]
    %v174 = vperm.slane %v172, 0
    %v176 = vadd.f32 %v170, %v174
    %v177 = vadd.f32 %v171, %v174
    %v178 = vpack.c.bf16 %v176, %v176
    %v179 = vpack.c.bf16 %v177, %v177
    %v180 = vunpack.c.l.bf16 %v178
    %v181 = vunpack.c.l.bf16 %v179
    %v182 = vmax.f32 %v180, 0.0
    %v183 = vmax.f32 %v181, 0.0
    %v184 = vpack.c.bf16 %v183, %v182
    %v185 = vld [vmem:[%s5] sm:$0xf]
    %v186 = vld [vmem:[%s5 + $0x4] sm:$0xf]
    %v187 = vld [vmem:[%s5 + $0x8] sm:$0xf]
    %v188 = vld [vmem:[%s5 + $0xc] sm:$0xf]
    %v189 = vld [vmem:[%s5 + $0x10] sm:$0xf]
    %v190 = vld [vmem:[%s5 + $0x14] sm:$0xf]
    %v191 = vld [vmem:[%s5 + $0x18] sm:$0xf]
    %v192 = vld [vmem:[%s5 + $0x1c] sm:$0xf]
    %v193 = vld [vmem:[%s5 + $0x20] sm:$0xf]
    %v194 = vld [vmem:[%s5 + $0x24] sm:$0xf]
    %v195 = vld [vmem:[%s5 + $0x28] sm:$0xf]
    %v196 = vld [vmem:[%s5 + $0x2c] sm:$0xf]
    %v197 = vld [vmem:[%s5 + $0x30] sm:$0xf]
    %v198 = vld [vmem:[%s5 + $0x34] sm:$0xf]
    %v199 = vld [vmem:[%s5 + $0x38] sm:$0xf]
    %v200 = vld [vmem:[%s5 + $0x3c] sm:$0xf]
    %v201 = vld [vmem:[%s6] sm:$0x1]
    %v203 = vperm.slane %v201, 0
    %v221 = vunpack.c.l.b16 %v185
    %v222 = vunpack.c.l.b16 %v186
    %v223 = vunpack.c.l.b16 %v187
    %v224 = vunpack.c.l.b16 %v188
    %v225 = vunpack.c.l.b16 %v189
    %v226 = vunpack.c.l.b16 %v190
    %v227 = vunpack.c.l.b16 %v191
    %v228 = vunpack.c.l.b16 %v192
    %v229 = vunpack.c.l.b16 %v193
    %v230 = vunpack.c.l.b16 %v194
    %v231 = vunpack.c.l.b16 %v195
    %v232 = vunpack.c.l.b16 %v196
    %v233 = vunpack.c.l.b16 %v197
    %v234 = vunpack.c.l.b16 %v198
    %v235 = vunpack.c.l.b16 %v199
    %v236 = vunpack.c.l.b16 %v200
    %v237 = vpack.c.b16 %v222, %v221
    %v238 = vpack.c.b16 %v224, %v223
    %v239 = vpack.c.b16 %v226, %v225
    %v240 = vpack.c.b16 %v228, %v227
    %v241 = vpack.c.b16 %v230, %v229
    %v242 = vpack.c.b16 %v232, %v231
    %v243 = vpack.c.b16 %v234, %v233
    %v244 = vpack.c.b16 %v236, %v235
    %253 = vmatpush.bf16.msra.mxu0 %v244
    %254 = vmatpush.bf16.msra.mxu0 %v243
    %255 = vmatpush.bf16.msra.mxu0 %v242
    %256 = vmatpush.bf16.msra.mxu0 %v241
    %257 = vmatpush.bf16.msra.mxu0 %v240
    %258 = vmatpush.bf16.msra.mxu0 %v239
    %259 = vmatpush.bf16.msra.mxu0 %v238
    %260 = vmatpush.bf16.msra.mxu0 %v237
    %261 = vmatmul.bf16.gmra.mxu0 %v184
    %v262 = vpop.f32.mrf.mxu0
    %v263 = vadd.f32 %v203, %v262
    %v264 = vpop.f32.mrf.mxu0
    %v265 = vadd.f32 %v203, %v264
    %266 = vdwg.mxu0
    %vm267 = vcmask 64512
    %268 = vst.msk [vmem:[#allocation2] sm:$0xff] %vm267, %v263
    %269 = vst.msk [vmem:[#allocation2 + $0x8] sm:$0xff] %vm267, %v265
    // Predicated region
    $region30: #{tpu_custom_call.1} parent=1 // pred_check
      _
    $region31: #{tpu_custom_call.1} parent=1 // pred_check_branch
      %271 = sbr.rel (0) target = $region33
    $region32: #{tpu_custom_call.1} parent=1 // pred_region
      %273 = vsyncadd [#allocation3], 0
      %s274 = sshll.u32 [#allocation2], 4
      %s275 = int_to_ptr.vmem [resolvable:$true] %s274
      %s276 = sshll.u32 %s7, 4
      %s277 = int_to_ptr.hbm [resolvable:$true] %s276
      %282 = dma.vmem_to_hbm [thread:$0]  %s275, 256, %s277, [#allocation3], 128, 128, 8
    $region33: #{tpu_custom_call.1} parent=1 // pred_fallthru
      _
    // Predicated region
    $region34: #{tpu_custom_call.1} parent=1 // pred_check
      _
    $region35: #{tpu_custom_call.1} parent=1 // pred_check_branch
      %284 = sbr.rel (0) target = $region37
    $region36: #{tpu_custom_call.1} parent=1 // pred_region
      %286 = dma.done [#allocation3], 256
    $region37: #{tpu_custom_call.1} parent=1 // pred_fallthru
      _
    %287 = vsyncpa [#allocation3], 1

</llo_original>
